<compile_context>
chip_gen: v6e
topology: v6e:2x2x1
jax: 0.10.0
libtpu: 0.0.40
codegen_flags: <defaults>
</compile_context>

<pallas_src>
import jax
import jax.numpy as jnp
from jax.experimental import pallas as pl
from jax.experimental.pallas import tpu as pltpu

_LANE = 128
_TS_CAP = 65536   # max (packed-)spatial lanes per grid step
_RB_CAP = 64      # max rows per block: 3 f32 (rb,128) accumulators -> 24 vregs


def _cdiv(a: int, b: int) -> int:
    return -(-a // b)


def _row_quantum(dtype) -> int:
    # sublane packing quantum per dtype width (f32: 8, bf16/f16: 16, int8/fp8: 32)
    return {4: 8, 2: 16, 1: 32}.get(jnp.dtype(dtype).itemsize, 8)


def _vmem_config():
    """Per-generation VMEM limit + double-buffered input budget (bytes)."""
    cap = 64 * 1024 * 1024                      # conservative fallback (v7x per-TC)
    try:
        cap = int(pltpu.get_tpu_info().vmem_capacity_bytes)
    except Exception:
        pass
    cap = max(cap, 32 * 1024 * 1024)
    limit = min(cap * 3 // 4, cap - 8 * 1024 * 1024)   # 96 MiB on 128-MiB parts, 48 MiB on v7x
    return limit, limit // 2


def _make_kernel(n_chunks: int, tail_w: int, mask_params, unroll: int):
    """mask_params: None, or static (ns_sp, ts, s_valid) enabling ragged-tail lane masking."""

    def kernel(x_ref, y_ref, xy_ref, xs_ref, ys_ref):
        s = pl.program_id(2)

        @pl.when(s == 0)
        def _():
            xy_ref[...] = jnp.zeros_like(xy_ref)
            xs_ref[...] = jnp.zeros_like(xs_ref)
            ys_ref[...] = jnp.zeros_like(ys_ref)

        rb = xy_ref.shape[0]

        if mask_params is not None:
            ns_sp, ts, s_valid = mask_params
            sp = pl.program_id(0)
            # valid lanes remaining in this tile (<=0 for fully out-of-range duplicate tiles)
            limit = s_valid - (sp * ns_sp + s) * ts
            lane = jax.lax.broadcasted_iota(jnp.int32, (rb, _LANE), 1)

        def chunk(lo, width):
            xc = x_ref[:, pl.ds(lo, width)].astype(jnp.float32)
            yc = y_ref[:, pl.ds(lo, width)].astype(jnp.float32)
            if mask_params is not None:
                m = lane[:, :width] < (limit - lo)
                xc = jnp.where(m, xc, 0.0)
                yc = jnp.where(m, yc, 0.0)
            return xc * yc, xc, yc

        if n_chunks > 0:
            def body(c, carry):
                a, b, d = carry
                lo = pl.multiple_of(c * _LANE, _LANE)
                pa, pb, pd = chunk(lo, _LANE)
                return (a + pa, b + pb, d + pd)

            z = jnp.zeros((rb, _LANE), jnp.float32)
            pa, pb, pd = jax.lax.fori_loop(0, n_chunks, body, (z, z, z), unroll=unroll)
            xy_ref[...] += pa
            xs_ref[...] += pb
            ys_ref[...] += pd

        if tail_w > 0:
            pa, pb, pd = chunk(n_chunks * _LANE, tail_w)
            xy_ref[:, 0:tail_w] += pa
            xs_ref[:, 0:tail_w] += pb
            ys_ref[:, 0:tail_w] += pd

    return kernel


def soft_dice_loss(x, y, smooth: float = 1.0):
    """x, y: (B, C, *spatial) arrays (y one-hot / soft, same shape as x). Returns scalar loss."""
    x = jnp.asarray(x)
    y = jnp.asarray(y)
    assert y.shape == x.shape, "expects y already one-hot / same shape as x"
    B, C = int(x.shape[0]), int(x.shape[1])
    BC = B * C
    S = 1
    for d in x.shape[2:]:
        S *= int(d)

    x2 = x.reshape(BC, S)
    y2 = y.reshape(BC, S)

    # --- sublane packing: densify rows when BC under-fills a vreg (free reshape) ---
    q = max(_row_quantum(x.dtype), _row_quantum(y.dtype))
    p = 1
    while BC * p < q and S % (2 * p) == 0 and S // (2 * p) >= _LANE:
        p *= 2
    rows, s_sub = BC * p, S // p
    x2 = x2.reshape(rows, s_sub)
    y2 = y2.reshape(rows, s_sub)

    # --- row blocking: cap rb so accumulators + live chunk loads fit the vreg file ---
    if rows <= _RB_CAP:
        rb, nr = rows, 1                       # full-dim block (any row count legal)
    else:
        rb = _RB_CAP                           # multiple of 8; ragged last row block is
        nr = _cdiv(rows, rb)                   # safe (OOB output rows dropped on write)

    # --- spatial tile from per-generation VMEM budget ---
    vmem_limit, input_budget = _vmem_config()
    in_bytes = jnp.dtype(x.dtype).itemsize + jnp.dtype(y.dtype).itemsize
    bytes_per_lane = 2 * rb * in_bytes         # 2 = double-buffered input tiles
    ts_budget = (input_budget // max(bytes_per_lane, 1)) // _LANE * _LANE
    ts_cap = max(_LANE, min(_TS_CAP, ts_budget))

    if s_sub <= ts_cap:
        # single spatial tile covering the full extent: no masking/padding needed
        ts, ns, n_sp, ns_sp = s_sub, 1, 1, 1
        n_chunks, tail_w = s_sub // _LANE, s_sub % _LANE
        mask_params = None
    else:
        ts = ts_cap                            # multiple of 128
        ns = _cdiv(s_sub, ts)
        n_chunks, tail_w = ts // _LANE, 0
        # 2-way "parallel" spatial split (both TCs on v7x); bound waste on 1-TC chips
        n_sp = 2 if (ns % 2 == 0 or ns >= 8) else 1
        ns_sp = _cdiv(ns, n_sp)
        ragged = (s_sub != ns * ts) or (n_sp * ns_sp != ns)
        mask_params = (ns_sp, ts, s_sub) if ragged else None

    last_blk = ns - 1
    if n_sp * ns_sp > ns:
        # duplicate trailing steps re-read the last block; the in-kernel mask zeroes them
        in_map = lambda sp, r, s: (r, jnp.minimum(sp * ns_sp + s, last_blk))
    else:
        in_map = lambda sp, r, s: (r, sp * ns_sp + s)
    out_map = lambda sp, r, s: (sp, r, 0)

    unroll = 4 if rb <= 32 else 2
    unroll = max(1, min(unroll, max(n_chunks, 1)))

    cost = pl.CostEstimate(
        flops=3 * rows * s_sub,
        transcendentals=0,
        bytes_accessed=rows * s_sub * in_bytes + 3 * n_sp * rows * _LANE * 4,
    )

    out_sds = jax.ShapeDtypeStruct((n_sp, rows, _LANE), jnp.float32)
    xy_s, x_s, y_s = pl.pallas_call(
        _make_kernel(n_chunks, tail_w, mask_params, unroll),
        out_shape=(out_sds, out_sds, out_sds),
        grid_spec=pltpu.PrefetchScalarGridSpec(
            num_scalar_prefetch=0,
            grid=(n_sp, nr, ns_sp),
            in_specs=[
                pl.BlockSpec((rb, ts), in_map),
                pl.BlockSpec((rb, ts), in_map),
            ],
            out_specs=[
                pl.BlockSpec((None, rb, _LANE), out_map),
                pl.BlockSpec((None, rb, _LANE), out_map),
                pl.BlockSpec((None, rb, _LANE), out_map),
            ],
        ),
        compiler_params=pltpu.CompilerParams(
            dimension_semantics=("parallel", "parallel", "arbitrary"),
            vmem_limit_bytes=vmem_limit,
        ),
        cost_estimate=cost,
    )(x2, y2)

    # --- tiny finalize in plain JAX: reduce sp halves + lanes, un-pack sublane folds, dice ---
    tp = xy_s.sum(axis=(0, 2)).reshape(BC, p).sum(axis=1)
    sx = x_s.sum(axis=(0, 2)).reshape(BC, p).sum(axis=1)
    sy = y_s.sum(axis=(0, 2)).reshape(BC, p).sum(axis=1)
    fp = sx - tp
    fn = sy - tp
    nominator = 2.0 * tp + smooth
    denominator = jnp.maximum(2.0 * tp + fp + fn + smooth, 1e-8)
    dc = nominator / denominator
    return -jnp.mean(dc)


def soft_dice_loss_ref(x, y, smooth: float = 1.0):
    """Pure-JAX reference mirroring the PyTorch SoftDiceLoss forward (defaults)."""
    x = jnp.asarray(x, jnp.float32)
    y = jnp.asarray(y, jnp.float32)
    axes = tuple(range(2, x.ndim))  # batch_dice=False
    tp = jnp.sum(x * y, axis=axes)
    fp = jnp.sum(x * (1.0 - y), axis=axes)
    fn = jnp.sum((1.0 - x) * y, axis=axes)
    dc = (2.0 * tp + smooth) / jnp.maximum(2.0 * tp + fp + fn + smooth, 1e-8)
    return -jnp.mean(dc)  # do_bg=True


if __name__ == "__main__":
    key = jax.random.PRNGKey(0)
    keys = jax.random.split(key, 10)

    def make_case(kx, ky, B, C, spatial, dtype):
        logits = jax.random.normal(kx, (B, C) + spatial, dtype=jnp.float32)
        xv = jax.nn.softmax(logits, axis=1).astype(dtype)
        labels = jax.random.randint(ky, (B,) + spatial, 0, C)
        yv = jnp.moveaxis(jax.nn.one_hot(labels, C, dtype=dtype), -1, 1)
        return xv, yv

    cases = [
        # (B, C, spatial), dtype, tol
        ((2, 4, (16, 16)), jnp.float32, 1e-5),         # small f32 baseline
        ((1, 3, (40, 40)), jnp.bfloat16, 1e-4),        # bf16 stream, sublane packing + ragged tail chunk
        ((4, 8, (16, 16)), jnp.float32, 1e-5),         # mid BC
        ((5, 20, (16, 16)), jnp.float32, 1e-5),        # rows > 64 -> rb cap + ragged last row block
        ((2, 2, (128, 128, 12)), jnp.float32, 5e-4),   # large spatial -> grid + 2-way spatial split + masking
    ]
    for i, ((B, C, spatial), dt, tol) in enumerate(cases):
        xv, yv = make_case(keys[2 * i], keys[2 * i + 1], B, C, spatial, dt)
        loss = jax.block_until_ready(soft_dice_loss(xv, yv, smooth=1.0))
        ref = jax.block_until_ready(soft_dice_loss_ref(xv, yv, smooth=1.0))
        assert jnp.allclose(loss, ref, atol=tol, rtol=tol), (i, loss, ref)

    print("KERNEL_OK")
</pallas_src>

<mosaic_0001>
module attributes {stable_mosaic.version = 11 : i64} {
  func.func @kernel(%arg0: i32, %arg1: i32, %arg2: i32, %arg3: memref<8x256xf32, #tpu.memory_space<vmem>>, %arg4: memref<8x256xf32, #tpu.memory_space<vmem>>, %arg5: memref<1x8x128xf32, #tpu.memory_space<vmem>>, %arg6: memref<1x8x128xf32, #tpu.memory_space<vmem>>, %arg7: memref<1x8x128xf32, #tpu.memory_space<vmem>>) attributes {dimension_semantics = [#tpu.dimension_semantics<parallel>, #tpu.dimension_semantics<parallel>, #tpu.dimension_semantics<arbitrary>], iteration_bounds = array<i64: 1, 1, 1>, scalar_prefetch = 0 : i64, scratch_operands = 0 : i64, tpu.core_type = #tpu.core_type<tc>, window_params = [{transform_indices = @transform_0, window_bounds = array<i64: 8, 256>}, {transform_indices = @transform_1, window_bounds = array<i64: 8, 256>}, {transform_indices = @transform_2, window_bounds = array<i64: 1, 8, 128>}, {transform_indices = @transform_3, window_bounds = array<i64: 1, 8, 128>}, {transform_indices = @transform_4, window_bounds = array<i64: 1, 8, 128>}]} {
    %c0_i32 = arith.constant 0 : i32
    %0 = arith.cmpi eq, %arg2, %c0_i32 : i32
    %1 = arith.extui %0 : i1 to i32
    %c0_i32_0 = arith.constant 0 : i32
    %2 = arith.cmpi ne, %1, %c0_i32_0 : i32
    scf.if %2 {
      %cst_24 = arith.constant 0.000000e+00 : f32
      %42 = vector.broadcast %cst_24 : f32 to vector<8x128xf32>
      %c0_25 = arith.constant 0 : index
      %c0_26 = arith.constant 0 : index
      %c0_27 = arith.constant 0 : index
      %43 = vector.load %arg5[%c0_25, %c0_26, %c0_27] : memref<1x8x128xf32, #tpu.memory_space<vmem>>, vector<1x8x128xf32>
      %44 = vector.shape_cast %43 : vector<1x8x128xf32> to vector<8x128xf32>
      %45 = vector.shape_cast %42 : vector<8x128xf32> to vector<1x8x128xf32>
      tpu.vector_store %arg5[%c0_25, %c0_26, %c0_27], %45 {strides = array<i32>} : memref<1x8x128xf32, #tpu.memory_space<vmem>>, vector<1x8x128xf32>,
      %cst_28 = arith.constant 0.000000e+00 : f32
      %46 = vector.broadcast %cst_28 : f32 to vector<8x128xf32>
      %c0_29 = arith.constant 0 : index
      %c0_30 = arith.constant 0 : index
      %c0_31 = arith.constant 0 : index
      %47 = vector.load %arg6[%c0_29, %c0_30, %c0_31] : memref<1x8x128xf32, #tpu.memory_space<vmem>>, vector<1x8x128xf32>
      %48 = vector.shape_cast %47 : vector<1x8x128xf32> to vector<8x128xf32>
      %49 = vector.shape_cast %46 : vector<8x128xf32> to vector<1x8x128xf32>
      tpu.vector_store %arg6[%c0_29, %c0_30, %c0_31], %49 {strides = array<i32>} : memref<1x8x128xf32, #tpu.memory_space<vmem>>, vector<1x8x128xf32>,
      %cst_32 = arith.constant 0.000000e+00 : f32
      %50 = vector.broadcast %cst_32 : f32 to vector<8x128xf32>
      %c0_33 = arith.constant 0 : index
      %c0_34 = arith.constant 0 : index
      %c0_35 = arith.constant 0 : index
      %51 = vector.load %arg7[%c0_33, %c0_34, %c0_35] : memref<1x8x128xf32, #tpu.memory_space<vmem>>, vector<1x8x128xf32>
      %52 = vector.shape_cast %51 : vector<1x8x128xf32> to vector<8x128xf32>
      %53 = vector.shape_cast %50 : vector<8x128xf32> to vector<1x8x128xf32>
      tpu.vector_store %arg7[%c0_33, %c0_34, %c0_35], %53 {strides = array<i32>} : memref<1x8x128xf32, #tpu.memory_space<vmem>>, vector<1x8x128xf32>,
    } else {
    }
    %cst = arith.constant 0.000000e+00 : f32
    %3 = vector.broadcast %cst : f32 to vector<8x128xf32>
    %c0_i32_1 = arith.constant 0 : i32
    %c128_i32 = arith.constant 128 : i32
    %4 = arith.muli %c0_i32_1, %c128_i32 : i32
    %5 = tpu.assume_multiple %4, 128 : i32
    %c0 = arith.constant 0 : index
    %6 = arith.index_cast %5 : i32 to index
    %7 = vector.load %arg3[%c0, %6] : memref<8x256xf32, #tpu.memory_space<vmem>>, vector<8x128xf32>
    %c0_2 = arith.constant 0 : index
    %8 = arith.index_cast %5 : i32 to index
    %9 = vector.load %arg4[%c0_2, %8] : memref<8x256xf32, #tpu.memory_space<vmem>>, vector<8x128xf32>
    %10 = arith.mulf %7, %9 : vector<8x128xf32>
    %11 = arith.addf %3, %10 : vector<8x128xf32>
    %12 = arith.addf %3, %7 : vector<8x128xf32>
    %13 = arith.addf %3, %9 : vector<8x128xf32>
    %c1_i32 = arith.constant 1 : i32
    %c128_i32_3 = arith.constant 128 : i32
    %14 = arith.muli %c1_i32, %c128_i32_3 : i32
    %15 = tpu.assume_multiple %14, 128 : i32
    %c0_4 = arith.constant 0 : index
    %16 = arith.index_cast %15 : i32 to index
    %17 = vector.load %arg3[%c0_4, %16] : memref<8x256xf32, #tpu.memory_space<vmem>>, vector<8x128xf32>
    %c0_5 = arith.constant 0 : index
    %18 = arith.index_cast %15 : i32 to index
    %19 = vector.load %arg4[%c0_5, %18] : memref<8x256xf32, #tpu.memory_space<vmem>>, vector<8x128xf32>
    %20 = arith.mulf %17, %19 : vector<8x128xf32>
    %21 = arith.addf %11, %20 : vector<8x128xf32>
    %22 = arith.addf %12, %17 : vector<8x128xf32>
    %23 = arith.addf %13, %19 : vector<8x128xf32>
    %c2_i32 = arith.constant 2 : i32
    %c0_6 = arith.constant 0 : index
    %c0_7 = arith.constant 0 : index
    %c0_8 = arith.constant 0 : index
    %24 = vector.load %arg5[%c0_6, %c0_7, %c0_8] : memref<1x8x128xf32, #tpu.memory_space<vmem>>, vector<1x8x128xf32>
    %25 = vector.shape_cast %24 : vector<1x8x128xf32> to vector<8x128xf32>
    %26 = arith.addf %25, %21 : vector<8x128xf32>
    %c0_9 = arith.constant 0 : index
    %c0_10 = arith.constant 0 : index
    %c0_11 = arith.constant 0 : index
    %27 = vector.load %arg5[%c0_9, %c0_10, %c0_11] : memref<1x8x128xf32, #tpu.memory_space<vmem>>, vector<1x8x128xf32>
    %28 = vector.shape_cast %27 : vector<1x8x128xf32> to vector<8x128xf32>
    %29 = vector.shape_cast %26 : vector<8x128xf32> to vector<1x8x128xf32>
    tpu.vector_store %arg5[%c0_9, %c0_10, %c0_11], %29 {strides = array<i32>} : memref<1x8x128xf32, #tpu.memory_space<vmem>>, vector<1x8x128xf32>,
    %c0_12 = arith.constant 0 : index
    %c0_13 = arith.constant 0 : index
    %c0_14 = arith.constant 0 : index
    %30 = vector.load %arg6[%c0_12, %c0_13, %c0_14] : memref<1x8x128xf32, #tpu.memory_space<vmem>>, vector<1x8x128xf32>
    %31 = vector.shape_cast %30 : vector<1x8x128xf32> to vector<8x128xf32>
    %32 = arith.addf %31, %22 : vector<8x128xf32>
    %c0_15 = arith.constant 0 : index
    %c0_16 = arith.constant 0 : index
    %c0_17 = arith.constant 0 : index
    %33 = vector.load %arg6[%c0_15, %c0_16, %c0_17] : memref<1x8x128xf32, #tpu.memory_space<vmem>>, vector<1x8x128xf32>
    %34 = vector.shape_cast %33 : vector<1x8x128xf32> to vector<8x128xf32>
    %35 = vector.shape_cast %32 : vector<8x128xf32> to vector<1x8x128xf32>
    tpu.vector_store %arg6[%c0_15, %c0_16, %c0_17], %35 {strides = array<i32>} : memref<1x8x128xf32, #tpu.memory_space<vmem>>, vector<1x8x128xf32>,
    %c0_18 = arith.constant 0 : index
    %c0_19 = arith.constant 0 : index
    %c0_20 = arith.constant 0 : index
    %36 = vector.load %arg7[%c0_18, %c0_19, %c0_20] : memref<1x8x128xf32, #tpu.memory_space<vmem>>, vector<1x8x128xf32>
    %37 = vector.shape_cast %36 : vector<1x8x128xf32> to vector<8x128xf32>
    %38 = arith.addf %37, %23 : vector<8x128xf32>
    %c0_21 = arith.constant 0 : index
    %c0_22 = arith.constant 0 : index
    %c0_23 = arith.constant 0 : index
    %39 = vector.load %arg7[%c0_21, %c0_22, %c0_23] : memref<1x8x128xf32, #tpu.memory_space<vmem>>, vector<1x8x128xf32>
    %40 = vector.shape_cast %39 : vector<1x8x128xf32> to vector<8x128xf32>
    %41 = vector.shape_cast %38 : vector<8x128xf32> to vector<1x8x128xf32>
    tpu.vector_store %arg7[%c0_21, %c0_22, %c0_23], %41 {strides = array<i32>} : memref<1x8x128xf32, #tpu.memory_space<vmem>>, vector<1x8x128xf32>,
    return
  }
  func.func @transform_0(%arg0: i32, %arg1: i32, %arg2: i32) -> (i32, i32) {
    %c1_i32 = arith.constant 1 : i32
    %0 = arith.muli %arg0, %c1_i32 : i32
    %1 = arith.addi %0, %arg2 : i32
    %c0_i32 = arith.constant 0 : i32
    return %arg1, %1 : i32, i32
  }
  func.func @transform_1(%arg0: i32, %arg1: i32, %arg2: i32) -> (i32, i32) {
    %c1_i32 = arith.constant 1 : i32
    %0 = arith.muli %arg0, %c1_i32 : i32
    %1 = arith.addi %0, %arg2 : i32
    %c0_i32 = arith.constant 0 : i32
    return %arg1, %1 : i32, i32
  }
  func.func @transform_2(%arg0: i32, %arg1: i32, %arg2: i32) -> (i32, i32, i32) {
    %c0_i32 = arith.constant 0 : i32
    %c0_i32_0 = arith.constant 0 : i32
    return %arg0, %arg1, %c0_i32 : i32, i32, i32
  }
  func.func @transform_3(%arg0: i32, %arg1: i32, %arg2: i32) -> (i32, i32, i32) {
    %c0_i32 = arith.constant 0 : i32
    %c0_i32_0 = arith.constant 0 : i32
    return %arg0, %arg1, %c0_i32 : i32, i32, i32
  }
  func.func @transform_4(%arg0: i32, %arg1: i32, %arg2: i32) -> (i32, i32, i32) {
    %c0_i32 = arith.constant 0 : i32
    %c0_i32_0 = arith.constant 0 : i32
    return %arg0, %arg1, %c0_i32 : i32, i32, i32
  }
}

</mosaic_0001>

<llo_original>
// kernel: tpu_custom_call.1
$region0: #{tpu_custom_call.1}
  #allocation0 [shape = 'u32[]', space=smem, size = 0x4, offset = 0x4, fixed_abs, tag = 'smem constant byte address 0x4 - core index']
  #allocation1 [shape = 'u32[144,128]{1,0:T(1,128)}', space=vmem, size = 0x12000, scoped, tag = 'internal scratch']
  %s0 = inlined_call_operand.hbm [shape: f32[8,256], index: 0, kind: input, shape index: {}]
  %s1 = inlined_call_operand.hbm [shape: f32[8,256], index: 1, kind: input, shape index: {}]
  %s2 = inlined_call_operand.hbm [shape: f32[1,8,128], index: 2, kind: output, shape index: {0}]
  %s3 = inlined_call_operand.hbm [shape: f32[1,8,128], index: 3, kind: output, shape index: {1}]
  %s4 = inlined_call_operand.hbm [shape: f32[1,8,128], index: 4, kind: output, shape index: {2}]
  %5 = xla_tuple %s2, %s3, %s4
  %s6 = sld [smem:[#allocation0]]
  $region46: #{tpu_custom_call.1} parent=0
    _
  %s8 = ssub.s32 1, %s6
  %s9 = scalar_select 0, %s8, %s6
  $region1: #{tpu_custom_call.1} parent=0
    #allocation2 [shape = 'u8[8192]{0}', space=vmem, size = 0x2000, scoped, tag = 'input window, operand 0, single buffered']
    #allocation3 [shape = 's32[1]{0}', space=sflag, size = 0x4, scoped, tag = 'scoped memory for tpu_custom_call.1']
    #allocation4 [shape = 's32[1]{0}', space=sflag, size = 0x4, scoped, tag = 'scoped memory for tpu_custom_call.1']
    #allocation5 [shape = 'u8[8192]{0}', space=vmem, size = 0x2000, scoped, tag = 'input window, operand 1, single buffered']
    #allocation6 [shape = 's32[1]{0}', space=sflag, size = 0x4, scoped, tag = 'scoped memory for tpu_custom_call.1']
    #allocation7 [shape = 'u8[4096]{0}', space=vmem, size = 0x1000, scoped, tag = 'output window, operand 0, single buffered']
    #allocation8 [shape = 'u8[4096]{0}', space=vmem, size = 0x1000, scoped, tag = 'output window, operand 1, single buffered']
    #allocation9 [shape = 's32[1]{0}', space=sflag, size = 0x4, scoped, tag = 'scoped memory for tpu_custom_call.1']
    #allocation10 [shape = 'u8[4096]{0}', space=vmem, size = 0x1000, scoped, tag = 'output window, operand 2, single buffered']
    %10 = vsyncpa [#allocation3], 0
    %11 = vsyncpa [#allocation6], 0
    %12 = vsyncpa [#allocation4], 0
    %13 = vsyncpa [#allocation9], 0
    // Predicated region
    $region2: #{tpu_custom_call.1} parent=1 // pred_check
      _
    $region3: #{tpu_custom_call.1} parent=1 // pred_check_branch
      %15 = sbr.rel (0) target = $region5
    $region4: #{tpu_custom_call.1} parent=1 // pred_region
      %s16 = sadd.s32 0, 0
      %s17 = smul.u32 2, %s16
      %s19 = ssub.s32 256, 256
      %20 = vsyncadd [#allocation3], %s19
      %s21 = smul.addr %s17, 128
      %s22 = scalar_lea.hbm %s0, %s21
      %s24 = sshll.u32 [#allocation2], 4
      %s25 = int_to_ptr.vmem [resolvable:$true] %s24
      %27 = dma.hbm_to_vmem [thread:$0]  %s22, 256, %s25, [#allocation3]
    $region5: #{tpu_custom_call.1} parent=1 // pred_fallthru
      _
    // Predicated region
    $region6: #{tpu_custom_call.1} parent=1 // pred_check
      _
    $region7: #{tpu_custom_call.1} parent=1 // pred_check_branch
      %29 = sbr.rel (0) target = $region9
    $region8: #{tpu_custom_call.1} parent=1 // pred_region
      %s30 = sadd.s32 0, 0
      %s31 = smul.u32 2, %s30
      %s33 = ssub.s32 256, 256
      %34 = vsyncadd [#allocation6], %s33
      %s35 = smul.addr %s31, 128
      %s36 = scalar_lea.hbm %s1, %s35
      %s38 = sshll.u32 [#allocation5], 4
      %s39 = int_to_ptr.vmem [resolvable:$true] %s38
      %41 = dma.hbm_to_vmem [thread:$0]  %s36, 256, %s39, [#allocation6]
    $region9: #{tpu_custom_call.1} parent=1 // pred_fallthru
      _
    // Predicated region
    $region10: #{tpu_custom_call.1} parent=1 // pred_check
      _
    $region11: #{tpu_custom_call.1} parent=1 // pred_check_branch
      %43 = sbr.rel (0) target = $region13
    $region12: #{tpu_custom_call.1} parent=1 // pred_region
      %44 = dma.done [#allocation3], 256
    $region13: #{tpu_custom_call.1} parent=1 // pred_fallthru
      _
    // Predicated region
    $region14: #{tpu_custom_call.1} parent=1 // pred_check
      _
    $region15: #{tpu_custom_call.1} parent=1 // pred_check_branch
      %46 = sbr.rel (0) target = $region17
    $region16: #{tpu_custom_call.1} parent=1 // pred_region
      %47 = dma.done [#allocation6], 256
    $region17: #{tpu_custom_call.1} parent=1 // pred_fallthru
      _
    %s48 = sadd.s32 0, 0
    %s49 = smul.u32 2, %s48
    %s50 = sadd.s32 0, 0
    %s51 = smul.u32 2, %s50
    %p52 = scmp.eq.s32.totalorder 0, 0
    // Predicated region
    $region18: #{tpu_custom_call.1} parent=1 // pred_check
      %p53 = pneg %p52
    $region19: #{tpu_custom_call.1} parent=1 // pred_check_branch
      %55 = sbr.rel (%p53) target = $region21
    $region20: #{tpu_custom_call.1} parent=1 // pred_region
      %56 = vst [vmem:[#allocation7] sm:$0xff] 0.0
      %57 = vst [vmem:[#allocation8] sm:$0xff] 0.0
      %58 = vst [vmem:[#allocation10] sm:$0xff] 0.0
    $region21: #{tpu_custom_call.1} parent=1 // pred_fallthru
      _
    %v59 = vld [vmem:[#allocation2] sm:$0xff]
    %v60 = vld [vmem:[#allocation5] sm:$0xff]
    %v61 = vmul.f32 %v59, %v60
    %v62 = vadd.f32 %v61, 0.0
    %v63 = vadd.f32 %v59, 0.0
    %v64 = vadd.f32 %v60, 0.0
    %s65 = scalar_lea.vmem [#allocation2], 8
    %v66 = vld [vmem:[%s65] sm:$0xff]
    %s67 = scalar_lea.vmem [#allocation5], 8
    %v68 = vld [vmem:[%s67] sm:$0xff]
    %v69 = vmul.f32 %v66, %v68
    %v70 = vadd.f32 %v62, %v69
    %v71 = vadd.f32 %v63, %v66
    %v72 = vadd.f32 %v64, %v68
    %v73 = vld [vmem:[#allocation7] sm:$0xff]
    %v74 = vadd.f32 %v73, %v70
    %75 = vst [vmem:[#allocation7] sm:$0xff] %v74
    %v76 = vld [vmem:[#allocation8] sm:$0xff]
    %v77 = vadd.f32 %v76, %v71
    %78 = vst [vmem:[#allocation8] sm:$0xff] %v77
    %v79 = vld [vmem:[#allocation10] sm:$0xff]
    %v80 = vadd.f32 %v79, %v72
    %81 = vst [vmem:[#allocation10] sm:$0xff] %v80
    // Predicated region
    $region22: #{tpu_custom_call.1} parent=1 // pred_check
      _
    $region23: #{tpu_custom_call.1} parent=1 // pred_check_branch
      %83 = sbr.rel (0) target = $region25
    $region24: #{tpu_custom_call.1} parent=1 // pred_region
      %s85 = ssub.s32 128, 128
      %86 = vsyncadd [#allocation4], %s85
      %s88 = sshll.u32 [#allocation7], 4
      %s89 = int_to_ptr.vmem [resolvable:$true] %s88
      %91 = dma.vmem_to_hbm [thread:$0]  %s89, 128, %s2, [#allocation4]
    $region25: #{tpu_custom_call.1} parent=1 // pred_fallthru
      _
    // Predicated region
    $region26: #{tpu_custom_call.1} parent=1 // pred_check
      _
    $region27: #{tpu_custom_call.1} parent=1 // pred_check_branch
      %93 = sbr.rel (0) target = $region29
    $region28: #{tpu_custom_call.1} parent=1 // pred_region
      %s95 = ssub.s32 128, 128
      %96 = vsyncadd [#allocation9], %s95
      %s98 = sshll.u32 [#allocation8], 4
      %s99 = int_to_ptr.vmem [resolvable:$true] %s98
      %101 = dma.vmem_to_hbm [thread:$0]  %s99, 128, %s3, [#allocation9]
    $region29: #{tpu_custom_call.1} parent=1 // pred_fallthru
      _
    // Predicated region
    $region30: #{tpu_custom_call.1} parent=1 // pred_check
      _
    $region31: #{tpu_custom_call.1} parent=1 // pred_check_branch
      %103 = sbr.rel (0) target = $region33
    $region32: #{tpu_custom_call.1} parent=1 // pred_region
      %s105 = ssub.s32 128, 128
      %106 = vsyncadd [#allocation9], %s105
      %s108 = sshll.u32 [#allocation10], 4
      %s109 = int_to_ptr.vmem [resolvable:$true] %s108
      %111 = dma.vmem_to_hbm [thread:$0]  %s109, 128, %s4, [#allocation9]
    $region33: #{tpu_custom_call.1} parent=1 // pred_fallthru
      _
    // Predicated region
    $region34: #{tpu_custom_call.1} parent=1 // pred_check
      _
    $region35: #{tpu_custom_call.1} parent=1 // pred_check_branch
      %113 = sbr.rel (0) target = $region37
    $region36: #{tpu_custom_call.1} parent=1 // pred_region
      %114 = dma.done [#allocation4], 128
    $region37: #{tpu_custom_call.1} parent=1 // pred_fallthru
      _
    // Predicated region
    $region38: #{tpu_custom_call.1} parent=1 // pred_check
      _
    $region39: #{tpu_custom_call.1} parent=1 // pred_check_branch
      %116 = sbr.rel (0) target = $region41
    $region40: #{tpu_custom_call.1} parent=1 // pred_region
      %117 = dma.done [#allocation9], 128
    $region41: #{tpu_custom_call.1} parent=1 // pred_fallthru
      _
    // Predicated region
    $region42: #{tpu_custom_call.1} parent=1 // pred_check
      _
    $region43: #{tpu_custom_call.1} parent=1 // pred_check_branch
      %119 = sbr.rel (0) target = $region45
    $region44: #{tpu_custom_call.1} parent=1 // pred_region
      %120 = dma.done [#allocation9], 128
    $region45: #{tpu_custom_call.1} parent=1 // pred_fallthru
      _
    %121 = vsyncpa [#allocation3], 1
    %122 = vsyncpa [#allocation6], 1
    %123 = vsyncpa [#allocation4], 1
    %124 = vsyncpa [#allocation9], 1

</llo_original>
